<compile_context>
chip_gen: v6e
topology: v6e:2x2x1
jax: 0.10.0
libtpu: 0.0.40
codegen_flags: <defaults>
</compile_context>

<pallas_src>
import jax
import jax.numpy as jnp
from jax.experimental import pallas as pl
from jax.experimental.pallas import tpu as pltpu


def _inject_noise_kernel(img_ref, noise_ref, w_ref, out_ref):
    # img_ref / out_ref: (tn, tc, thw)
    # noise_ref:         (tn, 1,  thw)  -> broadcast over channels (sublanes)
    # w_ref:             (1,  tc, 1)    -> broadcast over batch & spatial (lanes)
    img = img_ref[...].astype(jnp.float32)
    noise = noise_ref[...].astype(jnp.float32)
    w = w_ref[...].astype(jnp.float32)
    out_ref[...] = (img + noise * w).astype(out_ref.dtype)


def _round_down(x, m):
    return (x // m) * m


def _choose_tiles(N, C, HW, itemsize, tile_budget):
    """Pick (tn, tc, thw): lane-dense, layout-legal, image tile ~<= tile_budget."""
    # Sub-32-bit dtypes pack 2/4 rows per sublane; keep the channel tile a
    # multiple of the packed granule so vregs are fully packed.
    pack = max(8, 32 // max(1, itemsize))

    # Lane (spatial) tile: multiple of 128 and <= HW (ragged last block via
    # cdiv); full extent if HW < 128 (always layout-legal).
    if HW < 128:
        thw = HW
    else:
        thw = min(_round_down(HW, 128), 2048)

    # Sublane (channel) tile: multiple of `pack` (or full C when C < pack),
    # sized so one image tile stays around <= tile_budget bytes.
    budget_tc = max(pack, _round_down(tile_budget // (thw * itemsize), pack))
    if C <= pack:
        tc = C
    else:
        tc = max(pack, _round_down(min(C, budget_tc), pack))

    # Fold batch elements into the block while budget remains: small feature
    # maps otherwise spend most of each grid step on fixed per-step overhead.
    tile_bytes = max(1, tc * thw * itemsize)
    tn = max(1, min(N, tile_budget // tile_bytes))
    return tn, tc, thw


def inject_noise(image, noise, weight, *, donate_image=False, tile_budget=4 << 20):
    """image: (N, C, H, W), noise: (N, 1, H, W), weight: (1, C, 1, 1)."""
    N, C, H, W = image.shape
    assert noise.shape == (N, 1, H, W)
    assert weight.shape == (1, C, 1, 1)
    HW = H * W
    dtype = image.dtype

    img3 = image.reshape(N, C, HW)
    noise3 = noise.reshape(N, 1, HW)       # native dtype; cast happens in-kernel
    w3 = weight.reshape(1, C, 1)

    tn, tc, thw = _choose_tiles(N, C, HW, jnp.dtype(dtype).itemsize, tile_budget)
    grid = (pl.cdiv(N, tn), pl.cdiv(HW, thw), pl.cdiv(C, tc))

    out = pl.pallas_call(
        _inject_noise_kernel,
        out_shape=jax.ShapeDtypeStruct((N, C, HW), dtype),
        grid=grid,
        in_specs=[
            # image: lane-dense (tn, tc, thw) tile.
            pl.BlockSpec((tn, tc, thw), lambda n, hw, c: (n, c, hw)),
            # noise: constant along the innermost c axis -> resident in VMEM
            # across channel tiles (Pallas skips the re-DMA).
            pl.BlockSpec((tn, 1, thw), lambda n, hw, c: (n, 0, hw)),
            # weight: tiny (1, tc, 1) slab; with the 4 MiB budget the c axis
            # usually collapses to one tile, making its block index constant
            # so it also stays resident without per-step DMA.
            pl.BlockSpec((1, tc, 1), lambda n, hw, c: (0, c, 0)),
        ],
        out_specs=pl.BlockSpec((tn, tc, thw), lambda n, hw, c: (n, c, hw)),
        compiler_params=pltpu.CompilerParams(
            # c innermost stays sequential ("arbitrary") to protect noise/weight
            # residency; N / HW axes may shard across megacore TensorCores.
            dimension_semantics=("parallel", "parallel", "arbitrary"),
            # ~24 MiB actually used at a 4 MiB tile budget; 48 MiB leaves
            # headroom and is safely below v7x's 64 MiB physical VMEM per TC.
            vmem_limit_bytes=48 * 1024 * 1024,
        ),
        input_output_aliases={0: 0} if donate_image else {},
    )(img3, noise3, w3)

    return out.reshape(N, C, H, W)


if __name__ == "__main__":
    key = jax.random.PRNGKey(0)
    k_img, k_noise, k_w, k_img2, k_noise2, k_w2 = jax.random.split(key, 6)

    # Primary check: small, layout-aligned shape.
    N, C, H, W = 2, 4, 16, 16
    image = jax.random.normal(k_img, (N, C, H, W), dtype=jnp.float32)
    # torch.randn(noise_shape) equivalent — noise generation is plain-JAX glue
    # so the kernel result can be checked against a reference with identical
    # noise; the broadcast multiply-add hot path runs in the Pallas kernel.
    noise = jax.random.normal(k_noise, (N, 1, H, W), dtype=jnp.float32)
    # nn.Parameter(torch.randn((1, channels, 1, 1))) equivalent, deterministic.
    weight = jax.random.normal(k_w, (1, C, 1, 1), dtype=jnp.float32)

    out = inject_noise(image, noise, weight)
    jax.block_until_ready(out)
    ref = image + noise * weight
    assert out.shape == (N, C, H, W)
    assert jnp.allclose(out, ref, atol=1e-6), "mismatch vs reference (aligned)"

    # Secondary check: non-128-divisible spatial extent and non-multiple-of-8
    # channels exercise the cdiv / ragged-last-block (masked store) path.
    N2, C2, H2, W2 = 3, 3, 12, 12
    image2 = jax.random.normal(k_img2, (N2, C2, H2, W2), dtype=jnp.float32)
    noise2 = jax.random.normal(k_noise2, (N2, 1, H2, W2), dtype=jnp.float32)
    weight2 = jax.random.normal(k_w2, (1, C2, 1, 1), dtype=jnp.float32)
    out2 = inject_noise(image2, noise2, weight2)
    jax.block_until_ready(out2)
    ref2 = image2 + noise2 * weight2
    assert jnp.allclose(out2, ref2, atol=1e-6), "mismatch vs reference (ragged)"

    print("KERNEL_OK")
</pallas_src>

<mosaic_0001>
module attributes {stable_mosaic.version = 11 : i64} {
  func.func @_inject_noise_kernel(%arg0: i32, %arg1: i32, %arg2: i32, %arg3: memref<2x4x256xf32, #tpu.memory_space<vmem>>, %arg4: memref<2x1x256xf32, #tpu.memory_space<vmem>>, %arg5: memref<1x4x1xf32, #tpu.memory_space<vmem>>, %arg6: memref<2x4x256xf32, #tpu.memory_space<vmem>>) attributes {dimension_semantics = [#tpu.dimension_semantics<parallel>, #tpu.dimension_semantics<parallel>, #tpu.dimension_semantics<arbitrary>], iteration_bounds = array<i64: 1, 1, 1>, scalar_prefetch = 0 : i64, scratch_operands = 0 : i64, tpu.core_type = #tpu.core_type<tc>, window_params = [{transform_indices = @transform_0, window_bounds = array<i64: 2, 4, 256>}, {transform_indices = @transform_1, window_bounds = array<i64: 2, 1, 256>}, {transform_indices = @transform_2, window_bounds = array<i64: 1, 4, 1>}, {transform_indices = @transform_3, window_bounds = array<i64: 2, 4, 256>}]} {
    %c0 = arith.constant 0 : index
    %c0_0 = arith.constant 0 : index
    %c0_1 = arith.constant 0 : index
    %0 = vector.load %arg3[%c0, %c0_0, %c0_1] : memref<2x4x256xf32, #tpu.memory_space<vmem>>, vector<2x4x256xf32>
    %c0_2 = arith.constant 0 : index
    %c0_3 = arith.constant 0 : index
    %c0_4 = arith.constant 0 : index
    %1 = vector.load %arg4[%c0_2, %c0_3, %c0_4] : memref<2x1x256xf32, #tpu.memory_space<vmem>>, vector<2x1x256xf32>
    %c0_5 = arith.constant 0 : index
    %c0_6 = arith.constant 0 : index
    %c0_7 = arith.constant 0 : index
    %2 = vector.load %arg5[%c0_5, %c0_6, %c0_7] : memref<1x4x1xf32, #tpu.memory_space<vmem>>, vector<1x4x1xf32>
    %3 = vector.broadcast %1 : vector<2x1x256xf32> to vector<2x4x256xf32>
    %4 = vector.broadcast %2 : vector<1x4x1xf32> to vector<2x4x256xf32>
    %5 = arith.mulf %3, %4 : vector<2x4x256xf32>
    %6 = arith.addf %0, %5 : vector<2x4x256xf32>
    %c0_8 = arith.constant 0 : index
    %c0_9 = arith.constant 0 : index
    %c0_10 = arith.constant 0 : index
    %7 = vector.load %arg6[%c0_8, %c0_9, %c0_10] : memref<2x4x256xf32, #tpu.memory_space<vmem>>, vector<2x4x256xf32>
    tpu.vector_store %arg6[%c0_8, %c0_9, %c0_10], %6 {strides = array<i32>} : memref<2x4x256xf32, #tpu.memory_space<vmem>>, vector<2x4x256xf32>,
    return
  }
  func.func @transform_0(%arg0: i32, %arg1: i32, %arg2: i32) -> (i32, i32, i32) {
    %c0_i32 = arith.constant 0 : i32
    return %arg0, %arg2, %arg1 : i32, i32, i32
  }
  func.func @transform_1(%arg0: i32, %arg1: i32, %arg2: i32) -> (i32, i32, i32) {
    %c0_i32 = arith.constant 0 : i32
    %c0_i32_0 = arith.constant 0 : i32
    return %arg0, %c0_i32, %arg1 : i32, i32, i32
  }
  func.func @transform_2(%arg0: i32, %arg1: i32, %arg2: i32) -> (i32, i32, i32) {
    %c0_i32 = arith.constant 0 : i32
    %c0_i32_0 = arith.constant 0 : i32
    %c0_i32_1 = arith.constant 0 : i32
    return %c0_i32, %arg2, %c0_i32_0 : i32, i32, i32
  }
  func.func @transform_3(%arg0: i32, %arg1: i32, %arg2: i32) -> (i32, i32, i32) {
    %c0_i32 = arith.constant 0 : i32
    return %arg0, %arg2, %arg1 : i32, i32, i32
  }
}

</mosaic_0001>

<llo_original>
// kernel: tpu_custom_call.1
$region0: #{tpu_custom_call.1}
  #allocation0 [shape = 'u32[]', space=smem, size = 0x4, offset = 0x4, fixed_abs, tag = 'smem constant byte address 0x4 - core index']
  #allocation1 [shape = 'u32[144,128]{1,0:T(1,128)}', space=vmem, size = 0x12000, scoped, tag = 'internal scratch']
  %s0 = inlined_call_operand.hbm [shape: f32[2,4,256], index: 0, kind: input, shape index: {}]
  %s1 = inlined_call_operand.vmem [shape: f32[2,1,256], index: 1, kind: input, shape index: {}]
  %s2 = inlined_call_operand.vmem [shape: f32[1,4,1], index: 2, kind: input, shape index: {}]
  %s3 = inlined_call_operand.hbm [shape: f32[2,4,256], index: 3, kind: output, shape index: {}]
  %s4 = sld [smem:[#allocation0]]
  $region26: #{tpu_custom_call.1} parent=0
    _
  %s6 = ssub.s32 1, %s4
  %s7 = scalar_select 0, %s6, %s4
  $region1: #{tpu_custom_call.1} parent=0
    #allocation2 [shape = 'u8[8192]{0}', space=vmem, size = 0x2000, scoped, tag = 'input window, operand 0, single buffered']
    #allocation3 [shape = 's32[1]{0}', space=sflag, size = 0x4, scoped, tag = 'scoped memory for tpu_custom_call.1']
    #allocation4 [shape = 's32[1]{0}', space=sflag, size = 0x4, scoped, tag = 'scoped memory for tpu_custom_call.1']
    #allocation5 [shape = 'u8[8192]{0}', space=vmem, size = 0x2000, scoped, tag = 'output window, operand 0, single buffered']
    %8 = vsyncpa [#allocation3], 0
    %9 = vsyncpa [#allocation4], 0
    // Predicated region
    $region2: #{tpu_custom_call.1} parent=1 // pred_check
      _
    $region3: #{tpu_custom_call.1} parent=1 // pred_check_branch
      %11 = sbr.rel (0) target = $region5
    $region4: #{tpu_custom_call.1} parent=1 // pred_region
      %s13 = ssub.s32 256, 256
      %14 = vsyncadd [#allocation3], %s13
      %s15 = sshll.u32 [#allocation2], 4
      %s16 = int_to_ptr.vmem [resolvable:$true] %s15
      %21 = dma.hbm_to_vmem [thread:$0]  %s0, 256, %s16, [#allocation3], 128, 128, 8
    $region5: #{tpu_custom_call.1} parent=1 // pred_fallthru
      _
    // Predicated region
    $region6: #{tpu_custom_call.1} parent=1 // pred_check
      _
    $region7: #{tpu_custom_call.1} parent=1 // pred_check_branch
      %23 = sbr.rel (0) target = $region9
    $region8: #{tpu_custom_call.1} parent=1 // pred_region
      _
    $region9: #{tpu_custom_call.1} parent=1 // pred_fallthru
      _
    // Predicated region
    $region10: #{tpu_custom_call.1} parent=1 // pred_check
      _
    $region11: #{tpu_custom_call.1} parent=1 // pred_check_branch
      %25 = sbr.rel (0) target = $region13
    $region12: #{tpu_custom_call.1} parent=1 // pred_region
      _
    $region13: #{tpu_custom_call.1} parent=1 // pred_fallthru
      _
    // Predicated region
    $region14: #{tpu_custom_call.1} parent=1 // pred_check
      _
    $region15: #{tpu_custom_call.1} parent=1 // pred_check_branch
      %27 = sbr.rel (0) target = $region17
    $region16: #{tpu_custom_call.1} parent=1 // pred_region
      %28 = dma.done [#allocation3], 256
    $region17: #{tpu_custom_call.1} parent=1 // pred_fallthru
      _
    %v29 = vld [vmem:[#allocation2] sm:$0xff]
    %v30 = vld [vmem:[#allocation2 + $0x8] sm:$0xff]
    %v31 = vld [vmem:[%s1] sm:$0x3]
    %v32 = vld [vmem:[%s1 + $0x2] sm:$0x3]
    %v33 = vld [vmem:[%s2] sm:$0xf]
    %v36 = vlaneseq
    %v37 = vshrl.u32 %v36, 7
    %v38 = vsub.s32 0, %v37
    %v39 = vrot.slane %v31, %v38
    %v40 = vlaneseq
    %v41 = vshrl.u32 %v40, 7
    %v42 = vsub.s32 1, %v41
    %v43 = vrot.slane %v31, %v42
    %v44 = vlaneseq
    %v45 = vshrl.u32 %v44, 7
    %v46 = vsub.s32 0, %v45
    %v47 = vrot.slane %v32, %v46
    %v48 = vlaneseq
    %v49 = vshrl.u32 %v48, 7
    %v50 = vsub.s32 1, %v49
    %v51 = vrot.slane %v32, %v50
    %57 = vset.pattern.permute.xlu0 0
    %58 = vperm.xlu0 %57, %v33
    %v59 = vpop.permute.xlu0 %58
    %v61 = vmul.f32 %v39, %v59
    %v62 = vmul.f32 %v43, %v59
    %v63 = vmul.f32 %v47, %v59
    %v64 = vmul.f32 %v51, %v59
    %v69 = vcombine.low %v61, %v62
    %v70 = vcombine.low %v63, %v64
    %v73 = vadd.f32 %v29, %v69
    %v74 = vadd.f32 %v30, %v70
    %75 = vst [vmem:[#allocation5] sm:$0xff] %v73
    %76 = vst [vmem:[#allocation5 + $0x8] sm:$0xff] %v74
    // Predicated region
    $region18: #{tpu_custom_call.1} parent=1 // pred_check
      _
    $region19: #{tpu_custom_call.1} parent=1 // pred_check_branch
      %78 = sbr.rel (0) target = $region21
    $region20: #{tpu_custom_call.1} parent=1 // pred_region
      %s80 = ssub.s32 256, 256
      %81 = vsyncadd [#allocation4], %s80
      %s82 = sshll.u32 [#allocation5], 4
      %s83 = int_to_ptr.vmem [resolvable:$true] %s82
      %88 = dma.vmem_to_hbm [thread:$0]  %s83, 256, %s3, [#allocation4], 128, 128, 8
    $region21: #{tpu_custom_call.1} parent=1 // pred_fallthru
      _
    // Predicated region
    $region22: #{tpu_custom_call.1} parent=1 // pred_check
      _
    $region23: #{tpu_custom_call.1} parent=1 // pred_check_branch
      %90 = sbr.rel (0) target = $region25
    $region24: #{tpu_custom_call.1} parent=1 // pred_region
      %91 = dma.done [#allocation4], 256
    $region25: #{tpu_custom_call.1} parent=1 // pred_fallthru
      _
    %92 = vsyncpa [#allocation3], 1
    %93 = vsyncpa [#allocation4], 1

</llo_original>
